<compile_context>
chip_gen: v5e
topology: v5e:2x2
jax: 0.10.0
libtpu: 0.0.40
codegen_flags: <defaults>
</compile_context>

<pallas_src>
import math

import jax
import jax.numpy as jnp
from jax.experimental import pallas as pl
from jax.experimental.pallas import tpu as pltpu

INPUT_SIZE = 1
HIDDEN_SIZE = 32
SEQ_LEN = 1
BATCH_SIZE = SEQ_LEN * HIDDEN_SIZE   # 32, required by the module's fc layer
OUTPUT_SIZE = 2
LANE = 128                           # TPU lane width; 4*HIDDEN_SIZE == LANE here


# ----------------------------- Pallas kernel ----------------------------------

def _lstm_fc_fused_kernel(x_ref, p_ref, out_ref):
    """Fused single-step (seq_len == 1, h_0 == c_0 == 0) LSTM + final Linear.

    x_ref:   (B, I)        input at t=0 (I == 1 here)
    p_ref:   (40, 128)     packed params:
                             rows 0:B     W_fc^T zero-padded to 128 out columns
                             row  B       W_ih^T row, i/o gate columns * 0.5
                             row  B+1     (b_ih + b_hh), i/o gate columns * 0.5
                             row  B+2     b_fc zero-padded to 128 columns
                             rows B+3:40  zero padding (sublane alignment)
    out_ref: (B, 128)      lane-dense FC result; only [:, :OUTPUT_SIZE] is valid

    Because h_0 == 0 and c_0 == 0 (and T == 1):
      * the h @ W_hh^T term is identically zero  -> no recurrence matmul
      * the f-gate contribution f * c_0 is zero  -> no forget path
    """
    B = x_ref.shape[0]
    TH = B                      # fc in_features == seq_len * hidden == batch
    H = HIDDEN_SIZE

    wfc = p_ref[0:TH, :]            # (B, 128)
    wih_row = p_ref[TH:TH + 1, :]   # (1, 128)  pre-scaled i/o columns
    b_gates = p_ref[TH + 1:TH + 2, :]
    bfc = p_ref[TH + 2:TH + 3, :]

    # gates_pre = x @ W_ih^T + bias, with i/o columns already scaled by 0.5.
    # With I == 1 the contraction is a broadcasted VPU multiply ((B,1)*(1,128)).
    gates_pre = x_ref[...] * wih_row + b_gates      # (B, 128)

    # Single EUP push over the full lane-dense (B, 128) tensor.
    #   sigmoid(z) == 0.5 * (tanh(0.5 z) + 1)  -> i/o columns were pre-halved
    #   tanh(z)                                 -> g columns were NOT scaled
    th = jnp.tanh(gates_pre)
    i_g = 0.5 * (th[:, 0 * H:1 * H] + 1.0)          # sigmoid(gates_i)
    g_g = th[:, 2 * H:3 * H]                        # tanh(gates_g)
    o_g = 0.5 * (th[:, 3 * H:4 * H] + 1.0)          # sigmoid(gates_o)
    # f gate is dead: f_g * c_0 == 0.

    c_new = i_g * g_g
    h_new = o_g * jnp.tanh(c_new)                   # (B, H)

    # fc: linear_input = lstm_out.transpose(0,1).view(B, T*H) == h_new (T == 1).
    # Lane-dense (B, 128) store: unmasked vst, padded columns are garbage-free
    # zeros from the padded W_fc^T / b_fc.
    out_ref[...] = (jnp.dot(h_new, wfc, preferred_element_type=jnp.float32)
                    + bfc).astype(out_ref.dtype)


# ------------------------------- wrapper ---------------------------------------

def prepare_params(params):
    """One-time parameter prep: transpose, bias fusion, 0.5 gate pre-scaling,
    FC lane padding, and packing everything into a single (40,128) VMEM block.

    (W_hh is dropped: with h_0 == 0 and seq_len == 1 its contribution is zero.)
    """
    w_ih, w_hh, b_ih, b_hh, w_fc, b_fc = params
    H = w_hh.shape[1]
    G = 4 * H
    O, in_feat = w_fc.shape                      # in_feat == seq_len*H == batch

    # 0.5 pre-scale ONLY the i and o gate columns (sigmoid-via-tanh); the g
    # (cell candidate) columns must stay unscaled.  f columns are dead anyway.
    scale = jnp.ones((G,), jnp.float32)
    scale = scale.at[0 * H:1 * H].set(0.5)       # i gate
    scale = scale.at[3 * H:4 * H].set(0.5)       # o gate

    wih_row = jnp.asarray(w_ih, jnp.float32).T * scale[None, :]          # (I, 4H)
    b_gates = ((b_ih + b_hh).astype(jnp.float32) * scale).reshape(1, G)  # (1, 4H)

    wfc_pad = jnp.zeros((in_feat, LANE), jnp.float32)
    wfc_pad = wfc_pad.at[:, :O].set(jnp.asarray(w_fc, jnp.float32).T)    # (B, 128)
    bfc_pad = jnp.zeros((1, LANE), jnp.float32)
    bfc_pad = bfc_pad.at[0, :O].set(jnp.asarray(b_fc, jnp.float32))      # (1, 128)

    n_rows = in_feat + 3
    n_rows_pad = ((n_rows + 7) // 8) * 8                                 # 40
    blk = jnp.zeros((n_rows_pad, LANE), jnp.float32)
    blk = blk.at[:in_feat, :].set(wfc_pad)
    blk = blk.at[in_feat, :G].set(wih_row[0])
    blk = blk.at[in_feat + 1, :G].set(b_gates[0])
    blk = blk.at[in_feat + 2, :].set(bfc_pad[0])
    return blk


def lstm_forward(x, param_blk, output_size=OUTPUT_SIZE):
    """Forward pass matching the PyTorch module.

    x: (batch, seq, input_size) float32 (batch_first, like PyTorch).
    Returns: (batch, output_size) float32.
    """
    B, T, I = x.shape
    assert T == 1, "module's .view after .transpose is only valid for seq_len == 1"
    assert param_blk.shape == (((B + 3 + 7) // 8) * 8, LANE)

    x_bi = x.reshape(B, I).astype(jnp.float32)   # (B,1,1) -> (B,1): metadata-only

    vmem = pl.BlockSpec(memory_space=pltpu.MemorySpace.VMEM)
    out_full = pl.pallas_call(
        _lstm_fc_fused_kernel,
        out_shape=jax.ShapeDtypeStruct((B, LANE), jnp.float32),
        in_specs=[vmem, vmem],
        out_specs=vmem,
    )(x_bi, param_blk)
    return out_full[:, :output_size]             # drop lane padding in the wrapper


# --------------------------- params / reference --------------------------------

def init_params(key, input_size, hidden_size, batch_size, output_size):
    """Deterministic init mirroring the PyTorch parameter shapes."""
    ks = jax.random.split(key, 6)
    k_lstm = 1.0 / math.sqrt(hidden_size)
    k_fc = 1.0 / math.sqrt(batch_size)
    w_ih = jax.random.uniform(ks[0], (4 * hidden_size, input_size),
                              jnp.float32, -k_lstm, k_lstm)
    w_hh = jax.random.uniform(ks[1], (4 * hidden_size, hidden_size),
                              jnp.float32, -k_lstm, k_lstm)
    b_ih = jax.random.uniform(ks[2], (4 * hidden_size,), jnp.float32, -k_lstm, k_lstm)
    b_hh = jax.random.uniform(ks[3], (4 * hidden_size,), jnp.float32, -k_lstm, k_lstm)
    w_fc = jax.random.uniform(ks[4], (output_size, batch_size), jnp.float32, -k_fc, k_fc)
    b_fc = jax.random.uniform(ks[5], (output_size,), jnp.float32, -k_fc, k_fc)
    return (w_ih, w_hh, b_ih, b_hh, w_fc, b_fc)


def reference_forward(x, params):
    """Pure-JAX reference of the PyTorch forward (general T, for correctness check)."""
    w_ih, w_hh, b_ih, b_hh, w_fc, b_fc = params
    B, T, I = x.shape
    H = w_hh.shape[1]
    h = jnp.zeros((B, H), jnp.float32)
    c = jnp.zeros((B, H), jnp.float32)
    outs = []
    for t in range(T):
        gates = x[:, t, :] @ w_ih.T + b_ih + h @ w_hh.T + b_hh
        i_g = jax.nn.sigmoid(gates[:, 0 * H:1 * H])
        f_g = jax.nn.sigmoid(gates[:, 1 * H:2 * H])
        g_g = jnp.tanh(gates[:, 2 * H:3 * H])
        o_g = jax.nn.sigmoid(gates[:, 3 * H:4 * H])
        c = f_g * c + i_g * g_g
        h = o_g * jnp.tanh(c)
        outs.append(h)
    lstm_out = jnp.stack(outs, axis=1)                           # (B, T, H)
    linear_input = jnp.transpose(lstm_out, (1, 0, 2)).reshape(B, -1)
    return linear_input @ w_fc.T + b_fc


# ----------------------------------- main ---------------------------------------

if __name__ == "__main__":
    key = jax.random.PRNGKey(0)
    k_param, k_x = jax.random.split(key)

    params = init_params(k_param, INPUT_SIZE, HIDDEN_SIZE, BATCH_SIZE, OUTPUT_SIZE)
    param_blk = prepare_params(params)   # one-time: transpose/fuse/pre-scale/pack
    x = jax.random.normal(k_x, (BATCH_SIZE, SEQ_LEN, INPUT_SIZE), jnp.float32)

    out = jax.block_until_ready(lstm_forward(x, param_blk))
    ref = jax.block_until_ready(reference_forward(x, params))

    assert out.shape == (BATCH_SIZE, OUTPUT_SIZE), out.shape
    assert jnp.allclose(out, ref, rtol=1e-5, atol=1e-5), (
        f"max abs err = {jnp.max(jnp.abs(out - ref))}")

    print("KERNEL_OK")
</pallas_src>

<mosaic_0001>
module attributes {stable_mosaic.version = 11 : i64} {
  func.func @_lstm_fc_fused_kernel(%arg0: memref<32x1xf32, #tpu.memory_space<vmem>>, %arg1: memref<40x128xf32, #tpu.memory_space<vmem>>, %arg2: memref<32x128xf32, #tpu.memory_space<vmem>>) attributes {dimension_semantics = [], scalar_prefetch = 0 : i64, scratch_operands = 0 : i64, tpu.core_type = #tpu.core_type<tc>} {
    %c0 = arith.constant 0 : index
    %c0_0 = arith.constant 0 : index
    %0 = vector.load %arg1[%c0, %c0_0] : memref<40x128xf32, #tpu.memory_space<vmem>>, vector<32x128xf32>
    %c32 = arith.constant 32 : index
    %c0_1 = arith.constant 0 : index
    %1 = vector.load %arg1[%c32, %c0_1] : memref<40x128xf32, #tpu.memory_space<vmem>>, vector<1x128xf32>
    %c33 = arith.constant 33 : index
    %c0_2 = arith.constant 0 : index
    %2 = vector.load %arg1[%c33, %c0_2] : memref<40x128xf32, #tpu.memory_space<vmem>>, vector<1x128xf32>
    %c34 = arith.constant 34 : index
    %c0_3 = arith.constant 0 : index
    %3 = vector.load %arg1[%c34, %c0_3] : memref<40x128xf32, #tpu.memory_space<vmem>>, vector<1x128xf32>
    %c0_4 = arith.constant 0 : index
    %c0_5 = arith.constant 0 : index
    %4 = vector.load %arg0[%c0_4, %c0_5] : memref<32x1xf32, #tpu.memory_space<vmem>>, vector<32x1xf32>
    %5 = vector.broadcast %4 : vector<32x1xf32> to vector<32x128xf32>
    %6 = vector.broadcast %1 : vector<1x128xf32> to vector<32x128xf32>
    %7 = arith.mulf %5, %6 : vector<32x128xf32>
    %8 = vector.broadcast %2 : vector<1x128xf32> to vector<32x128xf32>
    %9 = arith.addf %7, %8 : vector<32x128xf32>
    %10 = math.tanh %9 : vector<32x128xf32>
    %11 = vector.extract_strided_slice %10 {offsets = [0, 0], sizes = [32, 32], strides = [1, 1]} : vector<32x128xf32> to vector<32x32xf32>
    %cst = arith.constant 1.000000e+00 : f32
    %12 = vector.broadcast %cst : f32 to vector<32x32xf32>
    %13 = arith.addf %11, %12 : vector<32x32xf32>
    %cst_6 = arith.constant 5.000000e-01 : f32
    %14 = vector.broadcast %cst_6 : f32 to vector<32x32xf32>
    %15 = arith.mulf %14, %13 : vector<32x32xf32>
    %16 = vector.extract_strided_slice %10 {offsets = [0, 64], sizes = [32, 32], strides = [1, 1]} : vector<32x128xf32> to vector<32x32xf32>
    %17 = vector.extract_strided_slice %10 {offsets = [0, 96], sizes = [32, 32], strides = [1, 1]} : vector<32x128xf32> to vector<32x32xf32>
    %cst_7 = arith.constant 1.000000e+00 : f32
    %18 = vector.broadcast %cst_7 : f32 to vector<32x32xf32>
    %19 = arith.addf %17, %18 : vector<32x32xf32>
    %cst_8 = arith.constant 5.000000e-01 : f32
    %20 = vector.broadcast %cst_8 : f32 to vector<32x32xf32>
    %21 = arith.mulf %20, %19 : vector<32x32xf32>
    %22 = arith.mulf %15, %16 : vector<32x32xf32>
    %23 = math.tanh %22 : vector<32x32xf32>
    %24 = arith.mulf %21, %23 : vector<32x32xf32>
    %cst_9 = arith.constant dense<0.000000e+00> : vector<32x128xf32>
    %25 = tpu.matmul %24, %0, %cst_9 {dimension_numbers = #tpu.dot_dimension_numbers<[1], [0], [0], [1], [0, 0, 1, 1], [], []>} : vector<32x32xf32>, vector<32x128xf32>, vector<32x128xf32> -> vector<32x128xf32>
    %26 = vector.broadcast %3 : vector<1x128xf32> to vector<32x128xf32>
    %27 = arith.addf %25, %26 : vector<32x128xf32>
    %c0_10 = arith.constant 0 : index
    %c0_11 = arith.constant 0 : index
    %28 = vector.load %arg2[%c0_10, %c0_11] : memref<32x128xf32, #tpu.memory_space<vmem>>, vector<32x128xf32>
    tpu.vector_store %arg2[%c0_10, %c0_11], %27 {strides = array<i32>} : memref<32x128xf32, #tpu.memory_space<vmem>>, vector<32x128xf32>,
    return
  }
}

</mosaic_0001>

<llo_original>
// kernel: tpu_custom_call.1
$region0: #{tpu_custom_call.1}
  #allocation0 [shape = 'u32[]', space=smem, size = 0x4, offset = 0x4, fixed_abs, tag = 'smem constant byte address 0x4 - core index']
  #allocation1 [shape = 'u32[72,128]{1,0:T(1,128)}', space=vmem, size = 0x9000, scoped, tag = 'internal scratch']
  %s0 = inlined_call_operand.vmem [shape: f32[32,1], index: 0, kind: input, shape index: {}]
  %s1 = inlined_call_operand.hbm [shape: f32[40,128], index: 1, kind: input, shape index: {}]
  %s2 = inlined_call_operand.hbm [shape: f32[32,128], index: 2, kind: output, shape index: {}]
  %s3 = sld [smem:[#allocation0]]
  $region22: #{tpu_custom_call.1} parent=0
    _
  %s5 = ssub.s32 1, %s3
  %s6 = scalar_select 0, %s5, %s3
  $region1: #{tpu_custom_call.1} parent=0
    #allocation2 [shape = 'u8[20480]{0}', space=vmem, size = 0x5000, scoped, tag = 'input window, operand 1, single buffered']
    #allocation3 [shape = 's32[1]{0}', space=sflag, size = 0x4, scoped, tag = 'scoped memory for tpu_custom_call.1']
    #allocation4 [shape = 's32[1]{0}', space=sflag, size = 0x4, scoped, tag = 'scoped memory for tpu_custom_call.1']
    #allocation5 [shape = 'u8[16384]{0}', space=vmem, size = 0x4000, scoped, tag = 'output window, operand 0, single buffered']
    %7 = vsyncpa [#allocation3], 0
    %8 = vsyncpa [#allocation4], 0
    // Predicated region
    $region2: #{tpu_custom_call.1} parent=1 // pred_check
      _
    $region3: #{tpu_custom_call.1} parent=1 // pred_check_branch
      %10 = sbr.rel (0) target = $region5
    $region4: #{tpu_custom_call.1} parent=1 // pred_region
      _
    $region5: #{tpu_custom_call.1} parent=1 // pred_fallthru
      _
    // Predicated region
    $region6: #{tpu_custom_call.1} parent=1 // pred_check
      _
    $region7: #{tpu_custom_call.1} parent=1 // pred_check_branch
      %12 = sbr.rel (0) target = $region9
    $region8: #{tpu_custom_call.1} parent=1 // pred_region
      %14 = vsyncadd [#allocation3], 0
      %s15 = sshll.u32 %s1, 4
      %s16 = int_to_ptr.hbm [resolvable:$true] %s15
      %s17 = sshll.u32 [#allocation2], 4
      %s18 = int_to_ptr.vmem [resolvable:$true] %s17
      %23 = dma.hbm_to_vmem [thread:$0]  %s16, 640, %s18, [#allocation3], 128, 128, 8
    $region9: #{tpu_custom_call.1} parent=1 // pred_fallthru
      _
    // Predicated region
    $region10: #{tpu_custom_call.1} parent=1 // pred_check
      _
    $region11: #{tpu_custom_call.1} parent=1 // pred_check_branch
      %25 = sbr.rel (0) target = $region13
    $region12: #{tpu_custom_call.1} parent=1 // pred_region
      %27 = dma.done [#allocation3], 640
    $region13: #{tpu_custom_call.1} parent=1 // pred_fallthru
      _
    %v28 = vld [vmem:[#allocation2] sm:$0xff]
    %v29 = vld [vmem:[#allocation2 + $0x8] sm:$0xff]
    %v30 = vld [vmem:[#allocation2 + $0x10] sm:$0xff]
    %v31 = vld [vmem:[#allocation2 + $0x18] sm:$0xff]
    %v32 = vld [vmem:[#allocation2 + $0x20] sm:$0x1]
    %v33 = vld [vmem:[#allocation2 + $0x21] sm:$0x1]
    %v34 = vld [vmem:[#allocation2 + $0x22] sm:$0x1]
    %v35 = vld [vmem:[%s0] sm:$0xff]
    %v36 = vld [vmem:[%s0 + $0x8] sm:$0xff]
    %v37 = vld [vmem:[%s0 + $0x10] sm:$0xff]
    %v38 = vld [vmem:[%s0 + $0x18] sm:$0xff]
    %40 = vset.pattern.permute.xlu0 0
    %41 = vperm.xlu0 %40, %v35
    %v42 = vpop.permute.xlu0 %41
    %45 = vset.pattern.permute.xlu0 0
    %46 = vperm.xlu0 %45, %v36
    %v47 = vpop.permute.xlu0 %46
    %50 = vset.pattern.permute.xlu0 0
    %51 = vperm.xlu0 %50, %v37
    %v52 = vpop.permute.xlu0 %51
    %55 = vset.pattern.permute.xlu0 0
    %56 = vperm.xlu0 %55, %v38
    %v57 = vpop.permute.xlu0 %56
    %v59 = vperm.slane %v32, 0
    %v60 = vmul.f32 %v42, %v59
    %v61 = vmul.f32 %v47, %v59
    %v62 = vmul.f32 %v52, %v59
    %v63 = vmul.f32 %v57, %v59
    %v64 = vperm.slane %v33, 0
    %v65 = vadd.f32 %v60, %v64
    %v66 = vadd.f32 %v61, %v64
    %v67 = vadd.f32 %v62, %v64
    %v68 = vadd.f32 %v63, %v64
    %v69 = vtanh.pop %v65
    %v70 = vtanh.pop %v66
    %v71 = vtanh.pop %v67
    %v72 = vtanh.pop %v68
    %v73 = vadd.f32 %v69, 1.0
    %v74 = vadd.f32 %v70, 1.0
    %v75 = vadd.f32 %v71, 1.0
    %v76 = vadd.f32 %v72, 1.0
    %v77 = vmul.f32 %v73, 0.5
    %v78 = vmul.f32 %v74, 0.5
    %v79 = vmul.f32 %v75, 0.5
    %v80 = vmul.f32 %v76, 0.5
    %85 = vrot.lane.b32.xlu0 %v69, 64
    %v86 = vpop.permute.xlu0 %85
    %87 = vrot.lane.b32.xlu0 %v70, 64
    %v88 = vpop.permute.xlu0 %87
    %89 = vrot.lane.b32.xlu0 %v71, 64
    %v90 = vpop.permute.xlu0 %89
    %91 = vrot.lane.b32.xlu0 %v72, 64
    %v92 = vpop.permute.xlu0 %91
    %v97 = vmul.f32 %v77, %v86
    %v98 = vmul.f32 %v78, %v88
    %v99 = vmul.f32 %v79, %v90
    %v100 = vmul.f32 %v80, %v92
    %v101 = vtanh.pop %v97
    %v102 = vtanh.pop %v98
    %v103 = vtanh.pop %v99
    %v104 = vtanh.pop %v100
    %109 = vrot.lane.b32.xlu0 %v101, 96
    %v110 = vpop.permute.xlu0 %109
    %111 = vrot.lane.b32.xlu0 %v102, 96
    %v112 = vpop.permute.xlu0 %111
    %113 = vrot.lane.b32.xlu0 %v103, 96
    %v114 = vpop.permute.xlu0 %113
    %115 = vrot.lane.b32.xlu0 %v104, 96
    %v116 = vpop.permute.xlu0 %115
    %v121 = vmul.f32 %v77, %v110
    %v122 = vmul.f32 %v78, %v112
    %v123 = vmul.f32 %v79, %v114
    %v124 = vmul.f32 %v80, %v116
    %v125 = vperm.slane %v34, 0
    %130 = vrot.lane.b32.xlu0 %v121, 32
    %v131 = vpop.permute.xlu0 %130
    %132 = vrot.lane.b32.xlu0 %v122, 32
    %v133 = vpop.permute.xlu0 %132
    %134 = vrot.lane.b32.xlu0 %v123, 32
    %v135 = vpop.permute.xlu0 %134
    %136 = vrot.lane.b32.xlu0 %v124, 32
    %v137 = vpop.permute.xlu0 %136
    %vm138 = vcmask 261120
    %v139 = vsel %vm138, %v131, 0
    %v141 = vsel %vm138, %v133, 0
    %v143 = vsel %vm138, %v135, 0
    %v145 = vsel %vm138, %v137, 0
    %147 = vmatpush.msra.mxu0 0.0
    %148 = vmatpush.msra.mxu0 0.0
    %149 = vmatpush.msra.mxu0 0.0
    %150 = vmatpush.msra.mxu0 0.0
    %151 = vmatpush.msra.mxu0 0.0
    %152 = vmatpush.msra.mxu0 0.0
    %153 = vmatpush.msra.mxu0 0.0
    %154 = vmatpush.msra.mxu0 0.0
    %155 = vmatpush.msra.mxu0 0.0
    %156 = vmatpush.msra.mxu0 0.0
    %157 = vmatpush.msra.mxu0 0.0
    %158 = vmatpush.msra.mxu0 0.0
    %159 = vmatpush.msra.mxu0 %v31
    %160 = vmatpush.msra.mxu0 %v30
    %161 = vmatpush.msra.mxu0 %v29
    %162 = vmatpush.msra.mxu0 %v28
    %163 = vmatmul.f32.gmra.mxu0 %v139
    %v164 = vpop.f32.mrf.mxu0
    %v165 = vadd.f32 %v125, %v164
    %166 = vmatmul.f32.gmra.mxu0 %v141
    %v167 = vpop.f32.mrf.mxu0
    %v168 = vadd.f32 %v125, %v167
    %169 = vmatmul.f32.gmra.mxu0 %v143
    %v170 = vpop.f32.mrf.mxu0
    %v171 = vadd.f32 %v125, %v170
    %172 = vmatmul.f32.gmra.mxu0 %v145
    %v173 = vpop.f32.mrf.mxu0
    %v174 = vadd.f32 %v125, %v173
    %175 = vdwg.mxu0
    %176 = vst [vmem:[#allocation5] sm:$0xff] %v165
    %177 = vst [vmem:[#allocation5 + $0x8] sm:$0xff] %v168
    %178 = vst [vmem:[#allocation5 + $0x10] sm:$0xff] %v171
    %179 = vst [vmem:[#allocation5 + $0x18] sm:$0xff] %v174
    // Predicated region
    $region14: #{tpu_custom_call.1} parent=1 // pred_check
      _
    $region15: #{tpu_custom_call.1} parent=1 // pred_check_branch
      %181 = sbr.rel (0) target = $region17
    $region16: #{tpu_custom_call.1} parent=1 // pred_region
      %183 = vsyncadd [#allocation4], 0
      %s184 = sshll.u32 [#allocation5], 4
      %s185 = int_to_ptr.vmem [resolvable:$true] %s184
      %s186 = sshll.u32 %s2, 4
      %s187 = int_to_ptr.hbm [resolvable:$true] %s186
      %192 = dma.vmem_to_hbm [thread:$0]  %s185, 512, %s187, [#allocation4], 128, 128, 8
    $region17: #{tpu_custom_call.1} parent=1 // pred_fallthru
      _
    // Predicated region
    $region18: #{tpu_custom_call.1} parent=1 // pred_check
      _
    $region19: #{tpu_custom_call.1} parent=1 // pred_check_branch
      %194 = sbr.rel (0) target = $region21
    $region20: #{tpu_custom_call.1} parent=1 // pred_region
      %196 = dma.done [#allocation4], 512
    $region21: #{tpu_custom_call.1} parent=1 // pred_fallthru
      _
    %197 = vsyncpa [#allocation3], 1
    %198 = vsyncpa [#allocation4], 1

</llo_original>
